<compile_context>
chip_gen: v7x
topology: tpu7x:2x2x1
jax: 0.10.0
libtpu: 0.0.40
codegen_flags: <defaults>
</compile_context>

<pallas_src>
import math

import jax
import jax.numpy as jnp
from jax.experimental import pallas as pl
from jax.experimental.pallas import tpu as pltpu

HIDDEN_LAYER = 256


def fcff_kernel(x_ref, w1_ref, b1_ref, w2_ref, b2_ref, w3_ref, b3_ref, o_ref):
    # Fused 3-layer MLP hot path. Matmuls run on the MXU with bf16 operands and
    # f32 accumulation; bias-add / ReLU run on the VPU in f32, then the hidden
    # activation is re-materialized ONCE as bf16 (single fused chain per layer).
    x = x_ref[...].astype(jnp.bfloat16)  # no-op if the caller already passes bf16
    h = jnp.dot(x, w1_ref[...], preferred_element_type=jnp.float32) + b1_ref[...]
    h = jnp.maximum(h, 0.0).astype(jnp.bfloat16)
    h = jnp.dot(h, w2_ref[...], preferred_element_type=jnp.float32) + b2_ref[...]
    h = jnp.maximum(h, 0.0).astype(jnp.bfloat16)
    # TODO(synk): if a bundle dump shows this N=16 matmul pinning to a single MXU
    # on v6e/v7x, split it along M into two jnp.dot calls on row halves of h.
    out = jnp.dot(h, w3_ref[...], preferred_element_type=jnp.float32) + b3_ref[...]
    o_ref[...] = out.astype(o_ref.dtype)


def _round_up(x, m):
    return ((x + m - 1) // m) * m


def _default_batch_tile(B, max_tile=1024):
    """Pick a batch tile.

    - Capped at `max_tile` (default 1024): per-row MXU cost is tile-independent
      above ~512 rows, so larger tiles only inflate VMEM footprint and padded
      work on the ragged last tile.
    - When the grid has more than one step, the step count is forced to be EVEN
      so v7x's two TensorCores (which shard the 'parallel' batch axis) get
      balanced work.  v5e/v6e (1 TC) are unaffected.
    - Rounded up to a multiple of 8 (sublane) so blocks stay layout-friendly.
    """
    if B <= 16:
        return B  # single tiny block; block dims == full array dims (always legal)
    steps = 2 * pl.cdiv(pl.cdiv(B, max_tile), 2)  # even step count, >= 2
    return min(max_tile, _round_up(pl.cdiv(B, steps), 8))


def prepare_fcff_params(params):
    """One-time parameter prep, hoisted out of the per-call path.

    Casts weights to bfloat16 (MXU operand dtype) and reshapes biases to (1, N)
    float32 rows.  Call this once and reuse the result for every forward call so
    steady-state calls launch exactly one (Pallas) kernel.
    """
    bf = jnp.bfloat16
    hidden = params["w1"].shape[1]
    dim_out = params["w3"].shape[1]
    return {
        "w1": params["w1"].astype(bf),
        "b1": params["b1"].reshape(1, hidden).astype(jnp.float32),
        "w2": params["w2"].astype(bf),
        "b2": params["b2"].reshape(1, hidden).astype(jnp.float32),
        "w3": params["w3"].astype(bf),
        "b3": params["b3"].reshape(1, dim_out).astype(jnp.float32),
    }


def _is_prepared(params):
    return params["w1"].dtype == jnp.bfloat16 and params["b1"].ndim == 2


def fcff_forward(x, params, *, batch_tile=None, max_batch_tile=1024,
                 out_dtype=jnp.float32):
    """Fused FCFF forward pass.

    x: (B, dim_in) float32 or bfloat16 (bf16 input is used as-is; no extra pass).
    params: raw params (f32 weights (in,out), 1-D biases) or the output of
        prepare_fcff_params().  Prefer prepared params to avoid per-call casts.
    out_dtype: jnp.float32 (PyTorch-matching, default) or jnp.bfloat16 if the
        consumer accepts it (denser lane utilization for the 16-wide output).
    """
    if not _is_prepared(params):
        params = prepare_fcff_params(params)  # fallback; hoist this in real use
    w1, b1, w2, b2, w3, b3 = (params[k] for k in ("w1", "b1", "w2", "b2", "w3", "b3"))

    B, dim_in = x.shape
    hidden = w1.shape[1]
    dim_out = w3.shape[1]

    if batch_tile is None:
        batch_tile = _default_batch_tile(B, max_batch_tile)

    grid = (pl.cdiv(B, batch_tile),)

    flops = 2 * B * (dim_in * hidden + hidden * hidden + hidden * dim_out)
    bytes_accessed = (
        x.size * x.dtype.itemsize
        + (w1.size + w2.size + w3.size) * 2
        + (b1.size + b2.size + b3.size) * 4
        + B * dim_out * jnp.dtype(out_dtype).itemsize
    )

    out = pl.pallas_call(
        fcff_kernel,
        out_shape=jax.ShapeDtypeStruct((B, dim_out), out_dtype),
        grid_spec=pltpu.PrefetchScalarGridSpec(
            num_scalar_prefetch=0,
            grid=grid,
            in_specs=[
                pl.BlockSpec((batch_tile, dim_in), lambda i: (i, 0)),  # x tile
                pl.BlockSpec((dim_in, hidden), lambda i: (0, 0)),      # w1 (resident)
                pl.BlockSpec((1, hidden), lambda i: (0, 0)),           # b1
                pl.BlockSpec((hidden, hidden), lambda i: (0, 0)),      # w2 (resident)
                pl.BlockSpec((1, hidden), lambda i: (0, 0)),           # b2
                pl.BlockSpec((hidden, dim_out), lambda i: (0, 0)),     # w3 (resident)
                pl.BlockSpec((1, dim_out), lambda i: (0, 0)),          # b3
            ],
            out_specs=pl.BlockSpec((batch_tile, dim_out), lambda i: (i, 0)),
        ),
        compiler_params=pltpu.CompilerParams(
            dimension_semantics=("parallel",),
            # 32 MiB scoped VMEM: ample for <=1024-row tiles on every generation
            # and leaves headroom inside v7x's 64 MiB/TC.  Do not raise to chase
            # bigger tiles -- the kernel is MXU-bound, not DMA-bound.
            vmem_limit_bytes=32 * 1024 * 1024,
        ),
        cost_estimate=pl.CostEstimate(
            flops=flops, transcendentals=0, bytes_accessed=bytes_accessed),
    )(x, w1, b1, w2, b2, w3, b3)

    return out


def xavier_uniform(key, fan_in, fan_out, gain=1.0, dtype=jnp.float32):
    # Matches torch.nn.init.xavier_uniform_: U(-a, a), a = gain*sqrt(6/(fan_in+fan_out)).
    # PyTorch weight is (out, in); we store the transpose (in, out) for x @ W.
    a = gain * math.sqrt(6.0 / (fan_in + fan_out))
    return jax.random.uniform(key, (fan_in, fan_out), dtype=dtype, minval=-a, maxval=a)


def init_fcff_params(key, dim_in, dim_out, hidden=HIDDEN_LAYER):
    # n_hidden=1 (module default) -> 3 Linear layers. Biases init to 0 (weights_init_).
    k1, k2, k3 = jax.random.split(key, 3)
    return {
        "w1": xavier_uniform(k1, dim_in, hidden),
        "b1": jnp.zeros((hidden,), jnp.float32),
        "w2": xavier_uniform(k2, hidden, hidden),
        "b2": jnp.zeros((hidden,), jnp.float32),
        "w3": xavier_uniform(k3, hidden, dim_out),
        "b3": jnp.zeros((dim_out,), jnp.float32),
    }


def fcff_ref_f32(x, params):
    # Pure f32 reference (matches the PyTorch module numerics).
    h = jnp.maximum(x @ params["w1"] + params["b1"], 0.0)
    h = jnp.maximum(h @ params["w2"] + params["b2"], 0.0)
    return h @ params["w3"] + params["b3"]


def fcff_ref_mixed(x, params):
    # Mirrors the kernel's numerics: bf16 MXU operands, f32 accumulation,
    # f32 bias-add / ReLU, bf16 re-cast of the hidden activation.
    bf = jnp.bfloat16
    h = jnp.dot(x.astype(bf), params["w1"].astype(bf),
                preferred_element_type=jnp.float32) + params["b1"]
    h = jnp.maximum(h, 0.0).astype(bf)
    h = jnp.dot(h, params["w2"].astype(bf),
                preferred_element_type=jnp.float32) + params["b2"]
    h = jnp.maximum(h, 0.0).astype(bf)
    return jnp.dot(h, params["w3"].astype(bf),
                   preferred_element_type=jnp.float32) + params["b3"]


if __name__ == "__main__":
    key = jax.random.PRNGKey(0)
    kx, kp = jax.random.split(key)

    # Small shapes consistent with FCFF: batch=32, dim_in=32, hidden=256, dim_out=16.
    B, dim_in, hidden, dim_out = 32, 32, HIDDEN_LAYER, 16

    x = jax.random.normal(kx, (B, dim_in), dtype=jnp.float32)
    raw_params = init_fcff_params(kp, dim_in, dim_out, hidden)

    # Hoisted one-time weight prep (bf16 weights, (1,N) f32 biases).
    params = prepare_fcff_params(raw_params)

    # Explicit small tile -> 4-step grid (exercises the pipelined batch loop).
    out_tiled = jax.block_until_ready(fcff_forward(x, params, batch_tile=8))
    # Default tile selection (even 2-step grid here; megacore-balanced on v7x).
    out_default = jax.block_until_ready(fcff_forward(x, params))
    # bf16 activations from the producer are consumed directly (no extra pass).
    out_bf16x = jax.block_until_ready(fcff_forward(x.astype(jnp.bfloat16), params))

    ref_mixed = fcff_ref_mixed(x, raw_params)
    ref_f32 = fcff_ref_f32(x, raw_params)

    for out in (out_tiled, out_default, out_bf16x):
        assert out.shape == (B, dim_out), out.shape
        # Tight vs. a reference that mimics the kernel's bf16/f32 mixed precision.
        assert jnp.allclose(out, ref_mixed, atol=2e-2, rtol=2e-2), \
            float(jnp.max(jnp.abs(out - ref_mixed)))
        # Loose vs. the pure f32 (PyTorch-equivalent) reference.
        assert jnp.allclose(out, ref_f32, atol=1e-1, rtol=1e-1), \
            float(jnp.max(jnp.abs(out - ref_f32)))

    print("KERNEL_OK")
</pallas_src>

<mosaic_0001>
module attributes {stable_mosaic.version = 11 : i64} {
  func.func @fcff_kernel(%arg0: i32, %arg1: memref<8x32xf32, #tpu.memory_space<vmem>>, %arg2: memref<32x256xbf16, #tpu.memory_space<vmem>>, %arg3: memref<1x256xf32, #tpu.memory_space<vmem>>, %arg4: memref<256x256xbf16, #tpu.memory_space<vmem>>, %arg5: memref<1x256xf32, #tpu.memory_space<vmem>>, %arg6: memref<256x16xbf16, #tpu.memory_space<vmem>>, %arg7: memref<1x16xf32, #tpu.memory_space<vmem>>, %arg8: memref<8x16xf32, #tpu.memory_space<vmem>>) attributes {dimension_semantics = [#tpu.dimension_semantics<parallel>], iteration_bounds = array<i64: 4>, scalar_prefetch = 0 : i64, scratch_operands = 0 : i64, tpu.core_type = #tpu.core_type<tc>, window_params = [{transform_indices = @transform_0, window_bounds = array<i64: 8, 32>}, {pipeline_mode = #tpu.pipeline_mode<synchronous>, transform_indices = @transform_1, window_bounds = array<i64: 32, 256>}, {pipeline_mode = #tpu.pipeline_mode<synchronous>, transform_indices = @transform_2, window_bounds = array<i64: 1, 256>}, {pipeline_mode = #tpu.pipeline_mode<synchronous>, transform_indices = @transform_3, window_bounds = array<i64: 256, 256>}, {pipeline_mode = #tpu.pipeline_mode<synchronous>, transform_indices = @transform_4, window_bounds = array<i64: 1, 256>}, {pipeline_mode = #tpu.pipeline_mode<synchronous>, transform_indices = @transform_5, window_bounds = array<i64: 256, 16>}, {pipeline_mode = #tpu.pipeline_mode<synchronous>, transform_indices = @transform_6, window_bounds = array<i64: 1, 16>}, {transform_indices = @transform_7, window_bounds = array<i64: 8, 16>}]} {
    %c0 = arith.constant 0 : index
    %c0_0 = arith.constant 0 : index
    %0 = vector.load %arg1[%c0, %c0_0] : memref<8x32xf32, #tpu.memory_space<vmem>>, vector<8x32xf32>
    %1 = arith.truncf %0 : vector<8x32xf32> to vector<8x32xbf16>
    %c0_1 = arith.constant 0 : index
    %c0_2 = arith.constant 0 : index
    %2 = vector.load %arg2[%c0_1, %c0_2] : memref<32x256xbf16, #tpu.memory_space<vmem>>, vector<32x256xbf16>
    %cst = arith.constant dense<0.000000e+00> : vector<8x256xf32>
    %3 = tpu.matmul %1, %2, %cst {dimension_numbers = #tpu.dot_dimension_numbers<[1], [0], [0], [1], [0, 0, 1, 1], [], []>} : vector<8x32xbf16>, vector<32x256xbf16>, vector<8x256xf32> -> vector<8x256xf32>
    %c0_3 = arith.constant 0 : index
    %c0_4 = arith.constant 0 : index
    %4 = vector.load %arg3[%c0_3, %c0_4] : memref<1x256xf32, #tpu.memory_space<vmem>>, vector<1x256xf32>
    %5 = vector.broadcast %4 : vector<1x256xf32> to vector<8x256xf32>
    %6 = arith.addf %3, %5 : vector<8x256xf32>
    %cst_5 = arith.constant 0.000000e+00 : f32
    %7 = vector.broadcast %cst_5 : f32 to vector<8x256xf32>
    %8 = arith.maximumf %6, %7 : vector<8x256xf32>
    %9 = arith.truncf %8 : vector<8x256xf32> to vector<8x256xbf16>
    %c0_6 = arith.constant 0 : index
    %c0_7 = arith.constant 0 : index
    %10 = vector.load %arg4[%c0_6, %c0_7] : memref<256x256xbf16, #tpu.memory_space<vmem>>, vector<256x256xbf16>
    %cst_8 = arith.constant dense<0.000000e+00> : vector<8x256xf32>
    %11 = tpu.matmul %9, %10, %cst_8 {dimension_numbers = #tpu.dot_dimension_numbers<[1], [0], [0], [1], [0, 0, 1, 1], [], []>} : vector<8x256xbf16>, vector<256x256xbf16>, vector<8x256xf32> -> vector<8x256xf32>
    %c0_9 = arith.constant 0 : index
    %c0_10 = arith.constant 0 : index
    %12 = vector.load %arg5[%c0_9, %c0_10] : memref<1x256xf32, #tpu.memory_space<vmem>>, vector<1x256xf32>
    %13 = vector.broadcast %12 : vector<1x256xf32> to vector<8x256xf32>
    %14 = arith.addf %11, %13 : vector<8x256xf32>
    %cst_11 = arith.constant 0.000000e+00 : f32
    %15 = vector.broadcast %cst_11 : f32 to vector<8x256xf32>
    %16 = arith.maximumf %14, %15 : vector<8x256xf32>
    %17 = arith.truncf %16 : vector<8x256xf32> to vector<8x256xbf16>
    %c0_12 = arith.constant 0 : index
    %c0_13 = arith.constant 0 : index
    %18 = vector.load %arg6[%c0_12, %c0_13] : memref<256x16xbf16, #tpu.memory_space<vmem>>, vector<256x16xbf16>
    %cst_14 = arith.constant dense<0.000000e+00> : vector<8x16xf32>
    %19 = tpu.matmul %17, %18, %cst_14 {dimension_numbers = #tpu.dot_dimension_numbers<[1], [0], [0], [1], [0, 0, 1, 1], [], []>} : vector<8x256xbf16>, vector<256x16xbf16>, vector<8x16xf32> -> vector<8x16xf32>
    %c0_15 = arith.constant 0 : index
    %c0_16 = arith.constant 0 : index
    %20 = vector.load %arg7[%c0_15, %c0_16] : memref<1x16xf32, #tpu.memory_space<vmem>>, vector<1x16xf32>
    %21 = vector.broadcast %20 : vector<1x16xf32> to vector<8x16xf32>
    %22 = arith.addf %19, %21 : vector<8x16xf32>
    %c0_17 = arith.constant 0 : index
    %c0_18 = arith.constant 0 : index
    %23 = vector.load %arg8[%c0_17, %c0_18] : memref<8x16xf32, #tpu.memory_space<vmem>>, vector<8x16xf32>
    tpu.vector_store %arg8[%c0_17, %c0_18], %22 {strides = array<i32>} : memref<8x16xf32, #tpu.memory_space<vmem>>, vector<8x16xf32>,
    return
  }
  func.func @transform_0(%arg0: i32) -> (i32, i32) {
    %c0_i32 = arith.constant 0 : i32
    %c0_i32_0 = arith.constant 0 : i32
    return %arg0, %c0_i32 : i32, i32
  }
  func.func @transform_1(%arg0: i32) -> (i32, i32) {
    %c0_i32 = arith.constant 0 : i32
    %c0_i32_0 = arith.constant 0 : i32
    %c0_i32_1 = arith.constant 0 : i32
    return %c0_i32, %c0_i32_0 : i32, i32
  }
  func.func @transform_2(%arg0: i32) -> (i32, i32) {
    %c0_i32 = arith.constant 0 : i32
    %c0_i32_0 = arith.constant 0 : i32
    %c0_i32_1 = arith.constant 0 : i32
    return %c0_i32, %c0_i32_0 : i32, i32
  }
  func.func @transform_3(%arg0: i32) -> (i32, i32) {
    %c0_i32 = arith.constant 0 : i32
    %c0_i32_0 = arith.constant 0 : i32
    %c0_i32_1 = arith.constant 0 : i32
    return %c0_i32, %c0_i32_0 : i32, i32
  }
  func.func @transform_4(%arg0: i32) -> (i32, i32) {
    %c0_i32 = arith.constant 0 : i32
    %c0_i32_0 = arith.constant 0 : i32
    %c0_i32_1 = arith.constant 0 : i32
    return %c0_i32, %c0_i32_0 : i32, i32
  }
  func.func @transform_5(%arg0: i32) -> (i32, i32) {
    %c0_i32 = arith.constant 0 : i32
    %c0_i32_0 = arith.constant 0 : i32
    %c0_i32_1 = arith.constant 0 : i32
    return %c0_i32, %c0_i32_0 : i32, i32
  }
  func.func @transform_6(%arg0: i32) -> (i32, i32) {
    %c0_i32 = arith.constant 0 : i32
    %c0_i32_0 = arith.constant 0 : i32
    %c0_i32_1 = arith.constant 0 : i32
    return %c0_i32, %c0_i32_0 : i32, i32
  }
  func.func @transform_7(%arg0: i32) -> (i32, i32) {
    %c0_i32 = arith.constant 0 : i32
    %c0_i32_0 = arith.constant 0 : i32
    return %arg0, %c0_i32 : i32, i32
  }
}

</mosaic_0001>

<llo_original>
// kernel: tpu_custom_call.1
$region0: #{tpu_custom_call.1}
  #allocation0 [shape = 'u32[]', space=smem, size = 0x4, offset = 0x4, fixed_abs, tag = 'smem constant byte address 0x4 - core index']
  #allocation1 [shape = 'u32[144,128]{1,0:T(1,128)}', space=vmem, size = 0x12000, scoped, tag = 'internal scratch']
  %s0 = inlined_call_operand.vmem [shape: f32[32,32], index: 0, kind: input, shape index: {}]
  %s1 = inlined_call_operand.vmem [shape: bf16[32,256], index: 1, kind: input, shape index: {}]
  %s2 = inlined_call_operand.vmem [shape: f32[1,256], index: 2, kind: input, shape index: {}]
  %s3 = inlined_call_operand.hbm [shape: bf16[256,256], index: 3, kind: input, shape index: {}]
  %s4 = inlined_call_operand.vmem [shape: f32[1,256], index: 4, kind: input, shape index: {}]
  %s5 = inlined_call_operand.vmem [shape: bf16[256,16], index: 5, kind: input, shape index: {}]
  %s6 = inlined_call_operand.vmem [shape: f32[1,16], index: 6, kind: input, shape index: {}]
  %s7 = inlined_call_operand.vmem [shape: f32[32,16], index: 7, kind: output, shape index: {}]
  %s8 = sld [smem:[#allocation0]]
  $region65: #{tpu_custom_call.1} parent=0
    _
  %s10 = ssub.s32 1, %s8
  %s11 = scalar_select 0, %s10, %s8
  $region1: #{tpu_custom_call.1} parent=0
    #allocation2 [shape = 'u8[131072]{0}', space=vmem, size = 0x20000, scoped, tag = 'input window, operand 3, single buffered']
    #allocation3 [shape = 's32[2]{0}', space=sflag, size = 0x8, scoped, tag = 'scoped memory for tpu_custom_call.1']
    %12 = vsyncpa [#allocation3], 0
    loop: start=0, step=1, limit=6
    $region2: #{tpu_custom_call.1} parent=1 // loop_pre_header
      _
    $region3: #{tpu_custom_call.1} parent=1 // loop_header
      %s14 = sphi 0, %s18
      %p15 = scmp.ge.s32.totalorder %s14, 6
      %s24 = sphi 0, %s26
      %s27 = sphi 0, %s24
      %s28 = sphi 0, %s27
      %s44 = sphi 0, %s28
      %s48 = sphi 0, %s48
      %s50 = sphi 0, %s48
      %s51 = sphi 0, %s50
      %s65 = sphi 0, %s51
      %s69 = sphi 0, %s69
      %s71 = sphi 0, %s69
      %s72 = sphi 0, %s71
      %s86 = sphi 0, %s72
      %s90 = sphi 0, %s90
      %s92 = sphi 0, %s90
      %s93 = sphi 0, %s92
      %s107 = sphi 0, %s93
      %s111 = sphi 0, %s111
      %s113 = sphi 0, %s111
      %s114 = sphi 0, %s113
      %s128 = sphi 0, %s114
      %s132 = sphi 0, %s132
      %s134 = sphi 0, %s132
      %s135 = sphi 0, %s134
      %s149 = sphi 0, %s135
      %s153 = sphi 0, %s153
      %s155 = sphi 0, %s153
      %s156 = sphi 0, %s155
      %s170 = sphi 0, %s156
      %s176 = sphi 0, %s178
      %s179 = sphi 0, %s176
      %s180 = sphi 0, %s179
      %s196 = sphi 0, %s180
    $region4: #{tpu_custom_call.1} parent=1 // loop_header_branch
      %17 = sbr.rel (%p15) target = $region8
    $region5: #{tpu_custom_call.1} parent=1 // loop_body
      %s19 = ssub.s32 %s14, 1
      %s20 = ssub.s32 %s14, 2
      %s21 = sadd.s32 %s14, 1
      %s22 = ssub.s32 %s14, %s21
      %p23 = scmp.eq.s32.totalorder %s22, 0
      %s25 = sadd.s32 %s24, 1
      %s26 = scalar_select %p23, %s24, %s25
      %p29 = pneg %p23
      %p30 = scmp.eq.s32.totalorder %s14, 3
      %p31 = por %p29, %p30
      %p32 = scmp.ne.s32.totalorder %s24, %s27
      %p33 = scmp.eq.s32.totalorder %s14, 0
      %p34 = por %p32, %p33
      %p35 = scmp.ne.s32.totalorder %s24, %s27
      %p36 = scmp.eq.s32.totalorder %s19, 3
      %p37 = por %p35, %p36
      %p38 = scmp.ne.s32.totalorder %s27, %s28
      %p39 = scmp.eq.s32.totalorder %s19, 0
      %p40 = por %p38, %p39
      %p41 = scmp.ne.s32.totalorder %s27, %s28
      %p42 = scmp.eq.s32.totalorder %s20, 3
      %p43 = por %p41, %p42
      %p45 = scmp.ne.s32.totalorder %s28, %s44
      %p46 = scmp.eq.s32.totalorder %s20, 0
      %p47 = por %p45, %p46
      %s49 = sadd.s32 %s48, 1
      %p52 = scmp.eq.s32.totalorder %s14, 3
      %p53 = scmp.ne.s32.totalorder %s48, %s50
      %p54 = scmp.eq.s32.totalorder %s14, 0
      %p55 = por %p53, %p54
      %p56 = scmp.ne.s32.totalorder %s48, %s50
      %p57 = scmp.eq.s32.totalorder %s19, 3
      %p58 = por %p56, %p57
      %p59 = scmp.ne.s32.totalorder %s50, %s51
      %p60 = scmp.eq.s32.totalorder %s19, 0
      %p61 = por %p59, %p60
      %p62 = scmp.ne.s32.totalorder %s50, %s51
      %p63 = scmp.eq.s32.totalorder %s20, 3
      %p64 = por %p62, %p63
      %p66 = scmp.ne.s32.totalorder %s51, %s65
      %p67 = scmp.eq.s32.totalorder %s20, 0
      %p68 = por %p66, %p67
      %s70 = sadd.s32 %s69, 1
      %p73 = scmp.eq.s32.totalorder %s14, 3
      %p74 = scmp.ne.s32.totalorder %s69, %s71
      %p75 = scmp.eq.s32.totalorder %s14, 0
      %p76 = por %p74, %p75
      %p77 = scmp.ne.s32.totalorder %s69, %s71
      %p78 = scmp.eq.s32.totalorder %s19, 3
      %p79 = por %p77, %p78
      %p80 = scmp.ne.s32.totalorder %s71, %s72
      %p81 = scmp.eq.s32.totalorder %s19, 0
      %p82 = por %p80, %p81
      %p83 = scmp.ne.s32.totalorder %s71, %s72
      %p84 = scmp.eq.s32.totalorder %s20, 3
      %p85 = por %p83, %p84
      %p87 = scmp.ne.s32.totalorder %s72, %s86
      %p88 = scmp.eq.s32.totalorder %s20, 0
      %p89 = por %p87, %p88
      %s91 = sadd.s32 %s90, 1
      %p94 = scmp.eq.s32.totalorder %s14, 3
      %p95 = scmp.ne.s32.totalorder %s90, %s92
      %p96 = scmp.eq.s32.totalorder %s14, 0
      %p97 = por %p95, %p96
      %p98 = scmp.ne.s32.totalorder %s90, %s92
      %p99 = scmp.eq.s32.totalorder %s19, 3
      %p100 = por %p98, %p99
      %p101 = scmp.ne.s32.totalorder %s92, %s93
      %p102 = scmp.eq.s32.totalorder %s19, 0
      %p103 = por %p101, %p102
      %p104 = scmp.ne.s32.totalorder %s92, %s93
      %p105 = scmp.eq.s32.totalorder %s20, 3
      %p106 = por %p104, %p105
      %p108 = scmp.ne.s32.totalorder %s93, %s107
      %p109 = scmp.eq.s32.totalorder %s20, 0
      %p110 = por %p108, %p109
      %s112 = sadd.s32 %s111, 1
      %p115 = scmp.eq.s32.totalorder %s14, 3
      %p116 = scmp.ne.s32.totalorder %s111, %s113
      %p117 = scmp.eq.s32.totalorder %s14, 0
      %p118 = por %p116, %p117
      %p119 = scmp.ne.s32.totalorder %s111, %s113
      %p120 = scmp.eq.s32.totalorder %s19, 3
      %p121 = por %p119, %p120
      %p122 = scmp.ne.s32.totalorder %s113, %s114
      %p123 = scmp.eq.s32.totalorder %s19, 0
      %p124 = por %p122, %p123
      %p125 = scmp.ne.s32.totalorder %s113, %s114
      %p126 = scmp.eq.s32.totalorder %s20, 3
      %p127 = por %p125, %p126
      %p129 = scmp.ne.s32.totalorder %s114, %s128
      %p130 = scmp.eq.s32.totalorder %s20, 0
      %p131 = por %p129, %p130
      %s133 = sadd.s32 %s132, 1
      %p136 = scmp.eq.s32.totalorder %s14, 3
      %p137 = scmp.ne.s32.totalorder %s132, %s134
      %p138 = scmp.eq.s32.totalorder %s14, 0
      %p139 = por %p137, %p138
      %p140 = scmp.ne.s32.totalorder %s132, %s134
      %p141 = scmp.eq.s32.totalorder %s19, 3
      %p142 = por %p140, %p141
      %p143 = scmp.ne.s32.totalorder %s134, %s135
      %p144 = scmp.eq.s32.totalorder %s19, 0
      %p145 = por %p143, %p144
      %p146 = scmp.ne.s32.totalorder %s134, %s135
      %p147 = scmp.eq.s32.totalorder %s20, 3
      %p148 = por %p146, %p147
      %p150 = scmp.ne.s32.totalorder %s135, %s149
      %p151 = scmp.eq.s32.totalorder %s20, 0
      %p152 = por %p150, %p151
      %s154 = sadd.s32 %s153, 1
      %p157 = scmp.eq.s32.totalorder %s14, 3
      %p158 = scmp.ne.s32.totalorder %s153, %s155
      %p159 = scmp.eq.s32.totalorder %s14, 0
      %p160 = por %p158, %p159
      %p161 = scmp.ne.s32.totalorder %s153, %s155
      %p162 = scmp.eq.s32.totalorder %s19, 3
      %p163 = por %p161, %p162
      %p164 = scmp.ne.s32.totalorder %s155, %s156
      %p165 = scmp.eq.s32.totalorder %s19, 0
      %p166 = por %p164, %p165
      %p167 = scmp.ne.s32.totalorder %s155, %s156
      %p168 = scmp.eq.s32.totalorder %s20, 3
      %p169 = por %p167, %p168
      %p171 = scmp.ne.s32.totalorder %s156, %s170
      %p172 = scmp.eq.s32.totalorder %s20, 0
      %p173 = por %p171, %p172
      %s174 = ssub.s32 %s14, %s21
      %p175 = scmp.eq.s32.totalorder %s174, 0
      %s177 = sadd.s32 %s176, 1
      %s178 = scalar_select %p175, %s176, %s177
      %p181 = pneg %p175
      %p182 = scmp.eq.s32.totalorder %s14, 3
      %p183 = por %p181, %p182
      %p184 = scmp.ne.s32.totalorder %s176, %s179
      %p185 = scmp.eq.s32.totalorder %s14, 0
      %p186 = por %p184, %p185
      %p187 = scmp.ne.s32.totalorder %s176, %s179
      %p188 = scmp.eq.s32.totalorder %s19, 3
      %p189 = por %p187, %p188
      %p190 = scmp.ne.s32.totalorder %s179, %s180
      %p191 = scmp.eq.s32.totalorder %s19, 0
      %p192 = por %p190, %p191
      %p193 = scmp.ne.s32.totalorder %s179, %s180
      %p194 = scmp.eq.s32.totalorder %s20, 3
      %p195 = por %p193, %p194
      %p197 = scmp.ne.s32.totalorder %s180, %s196
      %p198 = scmp.eq.s32.totalorder %s20, 0
      %p199 = por %p197, %p198
      %p200 = scmp.le.s32.totalorder 1, %s14
      %p201 = scmp.lt.s32.totalorder %s14, 5
      %p202 = pnand %p200, %p201
      %p203 = pneg %p202
      // Predicated region
      $region9: #{tpu_custom_call.1} parent=5 // pred_check
        _
      $region10: #{tpu_custom_call.1} parent=5 // pred_check_branch
        %205 = sbr.rel (%p202) target = $region12
      $region11: #{tpu_custom_call.1} parent=5 // pred_region
        %s206 = ssub.s32 %s14, 1
        // Predicated region
        $region13: #{tpu_custom_call.1} parent=11 // pred_check
          %p207 = pneg %p61
        $region14: #{tpu_custom_call.1} parent=11 // pred_check_branch
          %209 = sbr.rel (%p207) target = $region16
        $region15: #{tpu_custom_call.1} parent=11 // pred_region
          _
        $region16: #{tpu_custom_call.1} parent=11 // pred_fallthru
          _
        // Predicated region
        $region17: #{tpu_custom_call.1} parent=11 // pred_check
          %p210 = pneg %p82
        $region18: #{tpu_custom_call.1} parent=11 // pred_check_branch
          %212 = sbr.rel (%p210) target = $region20
        $region19: #{tpu_custom_call.1} parent=11 // pred_region
          _
        $region20: #{tpu_custom_call.1} parent=11 // pred_fallthru
          _
        // Predicated region
        $region21: #{tpu_custom_call.1} parent=11 // pred_check
          %p213 = pneg %p103
        $region22: #{tpu_custom_call.1} parent=11 // pred_check_branch
          %215 = sbr.rel (%p213) target = $region24
        $region23: #{tpu_custom_call.1} parent=11 // pred_region
          %s217 = ssub.s32 4096, 4096
          %218 = vsyncadd [#allocation3], %s217
          %s219 = sshll.u32 [#allocation2], 4
          %s220 = int_to_ptr.vmem [resolvable:$true] %s219
          %225 = dma.hbm_to_vmem [thread:$0]  %s3, 4096, %s220, [#allocation3], 128, 128, 8
        $region24: #{tpu_custom_call.1} parent=11 // pred_fallthru
          _
        // Predicated region
        $region25: #{tpu_custom_call.1} parent=11 // pred_check
          %p226 = pneg %p124
        $region26: #{tpu_custom_call.1} parent=11 // pred_check_branch
          %228 = sbr.rel (%p226) target = $region28
        $region27: #{tpu_custom_call.1} parent=11 // pred_region
          _
        $region28: #{tpu_custom_call.1} parent=11 // pred_fallthru
          _
        // Predicated region
        $region29: #{tpu_custom_call.1} parent=11 // pred_check
          %p229 = pneg %p145
        $region30: #{tpu_custom_call.1} parent=11 // pred_check_branch
          %231 = sbr.rel (%p229) target = $region32
        $region31: #{tpu_custom_call.1} parent=11 // pred_region
          _
        $region32: #{tpu_custom_call.1} parent=11 // pred_fallthru
          _
        // Predicated region
        $region33: #{tpu_custom_call.1} parent=11 // pred_check
          %p232 = pneg %p166
        $region34: #{tpu_custom_call.1} parent=11 // pred_check_branch
          %234 = sbr.rel (%p232) target = $region36
        $region35: #{tpu_custom_call.1} parent=11 // pred_region
          _
        $region36: #{tpu_custom_call.1} parent=11 // pred_fallthru
          _
      $region12: #{tpu_custom_call.1} parent=5 // pred_fallthru
        _
      %p235 = scmp.lt.s32.totalorder %s14, 4
      // Predicated region
      $region37: #{tpu_custom_call.1} parent=5 // pred_check
        %p236 = pneg %p235
      $region38: #{tpu_custom_call.1} parent=5 // pred_check_branch
        %238 = sbr.rel (%p236) target = $region40
      $region39: #{tpu_custom_call.1} parent=5 // pred_region
        // Predicated region
        $region41: #{tpu_custom_call.1} parent=39 // pred_check
          %p239 = pneg %p34
        $region42: #{tpu_custom_call.1} parent=39 // pred_check_branch
          %241 = sbr.rel (%p239) target = $region44
        $region43: #{tpu_custom_call.1} parent=39 // pred_region
          %p242 = scmp.lt.s32.totalorder %s14, 3
          %s243 = scalar_select %p242, %s14, 3
          %s244 = smul.addr %s243, 8
          %s245 = scalar_lea.vmem %s0, %s244
        $region44: #{tpu_custom_call.1} parent=39 // pred_fallthru
          _
      $region40: #{tpu_custom_call.1} parent=5 // pred_fallthru
        _
      %p246 = scmp.le.s32.totalorder 1, %s14
      %p247 = scmp.lt.s32.totalorder %s14, 5
      %p248 = pnand %p246, %p247
      %p249 = pneg %p248
      // Predicated region
      $region45: #{tpu_custom_call.1} parent=5 // pred_check
        _
      $region46: #{tpu_custom_call.1} parent=5 // pred_check_branch
        %251 = sbr.rel (%p248) target = $region48
      $region47: #{tpu_custom_call.1} parent=5 // pred_region
        %s252 = ssub.s32 %s14, 1
        // Predicated region
        $region49: #{tpu_custom_call.1} parent=47 // pred_check
          %p253 = pneg %p103
        $region50: #{tpu_custom_call.1} parent=47 // pred_check_branch
          %255 = sbr.rel (%p253) target = $region52
        $region51: #{tpu_custom_call.1} parent=47 // pred_region
          %256 = dma.done [#allocation3], 4096
        $region52: #{tpu_custom_call.1} parent=47 // pred_fallthru
          _
        %p257 = scmp.lt.s32.totalorder %s19, 3
        %s258 = scalar_select %p257, %s19, 3
        %s259 = smul.addr %s258, 8
        %s260 = scalar_lea.vmem %s0, %s259
        %p261 = pneg %p40
        %p262 = pneg %p37
        %p263 = pneg %p61
        %p264 = pneg %p58
        %p265 = pneg %p82
        %p266 = pneg %p79
        %p267 = pneg %p103
        %p268 = pneg %p100
        %p269 = pneg %p124
        %p270 = pneg %p121
        %p271 = pneg %p145
        %p272 = pneg %p142
        %p273 = pneg %p166
        %p274 = pneg %p163
        %p275 = pneg %p192
        %p276 = pneg %p189
        %p277 = scmp.lt.s32.totalorder %s19, 3
        %s278 = scalar_select %p277, %s19, 3
        %s279 = smul.addr %s278, 8
        %s280 = scalar_lea.vmem %s7, %s279
        %p281 = scmp.lt.s32.totalorder %s19, 3
        %s282 = scalar_select %p281, %s19, 3
        %s283 = smul.addr %s282, 8
        %s284 = scalar_lea.vmem %s0, %s283
        %p285 = scmp.lt.s32.totalorder %s19, 3
        %s286 = scalar_select %p285, %s19, 3
        %s287 = smul.addr %s286, 8
        %s288 = scalar_lea.vmem %s7, %s287
        %v290 = vld [vmem:[%s284] sm:$0xff]
        %v291 = vpack.c.bf16 %v290, %v290
        %v292 = vld [vmem:[%s1] sm:$0xff]
        %v293 = vld [vmem:[%s1 + $0x8] sm:$0xff]
        %v294 = vld [vmem:[%s1 + $0x10] sm:$0xff]
        %v295 = vld [vmem:[%s1 + $0x18] sm:$0xff]
        %v296 = vld [vmem:[%s2] sm:$0x3]
        %v298 = vlaneseq
        %v299 = vshrl.u32 %v298, 7
        %v300 = vsub.s32 0, %v299
        %v301 = vrot.slane %v296, %v300
        %v302 = vlaneseq
        %v303 = vshrl.u32 %v302, 7
        %v304 = vsub.s32 1, %v303
        %v305 = vrot.slane %v296, %v304
        %v312 = vunpack.c.l.b16 %v292
        %v313 = vunpack.c.h.b16 %v292
        %v314 = vunpack.c.l.b16 %v293
        %v315 = vunpack.c.h.b16 %v293
        %v316 = vunpack.c.l.b16 %v294
        %v317 = vunpack.c.h.b16 %v294
        %v318 = vunpack.c.l.b16 %v295
        %v319 = vunpack.c.h.b16 %v295
        %v320 = vpack.c.b16 %v314, %v312
        %v321 = vpack.c.b16 %v315, %v313
        %v322 = vpack.c.b16 %v318, %v316
        %v323 = vpack.c.b16 %v319, %v317
        %vm328 = vcmask 261120
        %v330 = vsel %vm328, %v291, 0
        %332 = vmatprep.subr.bf16.mxu0 %v321
        %333 = vmatpush1.bf16.msra.mxu0 %v320
        %334 = vmatprep.subr.bf16.mxu0 %v323
        %335 = vmatpush1.bf16.msra.mxu0 %v322
        %336 = vmatprep.subr.bf16.mxu0 0
        %337 = vmatpush1.bf16.msra.mxu0 0
        %338 = vmatprep.subr.bf16.mxu0 0
        %339 = vmatpush1.bf16.msra.mxu0 0
        %340 = vmatprep.subr.bf16.mxu0 0
        %341 = vmatpush1.bf16.msra.mxu0 0
        %342 = vmatprep.subr.bf16.mxu0 0
        %343 = vmatpush1.bf16.msra.mxu0 0
        %344 = vmatprep.subr.bf16.mxu0 0
        %345 = vmatpush1.bf16.msra.mxu0 0
        %346 = vmatprep.subr.bf16.mxu0 0
        %347 = vmatpush1.bf16.msra.mxu0 0
        %348 = vmatprep.subr.bf16.mxu0 0
        %349 = vmatpush1.bf16.msra.mxu0 0
        %350 = vmatprep.subr.bf16.mxu0 0
        %351 = vmatpush1.bf16.msra.mxu0 0
        %352 = vmatprep.subr.bf16.mxu0 0
        %353 = vmatpush1.bf16.msra.mxu0 0
        %354 = vmatprep.subr.bf16.mxu0 0
        %355 = vmatpush1.bf16.msra.mxu0 0
        %356 = vmatprep.subr.bf16.mxu0 0
        %357 = vmatpush1.bf16.msra.mxu0 0
        %358 = vmatprep.subr.bf16.mxu0 0
        %359 = vmatpush1.bf16.msra.mxu0 0
        %360 = vmatprep.subr.bf16.mxu0 0
        %361 = vmatpush1.bf16.msra.mxu0 0
        %362 = vmatprep.subr.bf16.mxu0 0
        %363 = vmatpush1.bf16.msra.mxu0 0
        %364 = vmatprep.mubr.bf16.mxu0 0
        %365 = vmatmul.mubr.bf16.gmra.mrb[0].mxu0 %v330
        %v366 = vpop.f32.mrb[0].mxu0
        %v367 = vadd.f32 %v301, %v366
        %v368 = vpop.f32.mrb[0].mxu0
        %v369 = vadd.f32 %v305, %v368
        %v370 = vpop.f32.mrb[0].mxu0
        %v371 = vpop.f32.mrb[0].mxu0
        %372 = vdwg.mxu0
        %v373 = vmax.f32 %v367, 0.0
        %v374 = vmax.f32 %v369, 0.0
        %v375 = vpack.c.bf16 %v373, %v373
        %v376 = vpack.c.bf16 %v374, %v374
        %v377 = vld [vmem:[#allocation2] sm:$0xff]
        %v378 = vld [vmem:[#allocation2 + $0x8] sm:$0xff]
        %v379 = vld [vmem:[#allocation2 + $0x10] sm:$0xff]
        %v380 = vld [vmem:[#allocation2 + $0x18] sm:$0xff]
        %v381 = vld [vmem:[#allocation2 + $0x20] sm:$0xff]
        %v382 = vld [vmem:[#allocation2 + $0x28] sm:$0xff]
        %v383 = vld [vmem:[#allocation2 + $0x30] sm:$0xff]
        %v384 = vld [vmem:[#allocation2 + $0x38] sm:$0xff]
        %v385 = vld [vmem:[#allocation2 + $0x40] sm:$0xff]
        %v386 = vld [vmem:[#allocation2 + $0x48] sm:$0xff]
        %v387 = vld [vmem:[#allocation2 + $0x50] sm:$0xff]
        %v388 = vld [vmem:[#allocation2 + $0x58] sm:$0xff]
        %v389 = vld [vmem:[#allocation2 + $0x60] sm:$0xff]
        %v390 = vld [vmem:[#allocation2 + $0x68] sm:$0xff]
        %v391 = vld [vmem:[#allocation2 + $0x70] sm:$0xff]
        %v392 = vld [vmem:[#allocation2 + $0x78] sm:$0xff]
        %v393 = vld [vmem:[#allocation2 + $0x80] sm:$0xff]
        %v394 = vld [vmem:[#allocation2 + $0x88] sm:$0xff]
        %v395 = vld [vmem:[#allocation2 + $0x90] sm:$0xff]
        %v396 = vld [vmem:[#allocation2 + $0x98] sm:$0xff]
        %v397 = vld [vmem:[#allocation2 + $0xa0] sm:$0xff]
        %v398 = vld [vmem:[#allocation2 + $0xa8] sm:$0xff]
        %v399 = vld [vmem:[#allocation2 + $0xb0] sm:$0xff]
        %v400 = vld [vmem:[#allocation2 + $0xb8] sm:$0xff]
        %v401 = vld [vmem:[#allocation2 + $0xc0] sm:$0xff]
        %v402 = vld [vmem:[#allocation2 + $0xc8] sm:$0xff]
        %v403 = vld [vmem:[#allocation2 + $0xd0] sm:$0xff]
        %v404 = vld [vmem:[#allocation2 + $0xd8] sm:$0xff]
        %v405 = vld [vmem:[#allocation2 + $0xe0] sm:$0xff]
        %v406 = vld [vmem:[#allocation2 + $0xe8] sm:$0xff]
        %v407 = vld [vmem:[#allocation2 + $0xf0] sm:$0xff]
        %v408 = vld [vmem:[#allocation2 + $0xf8] sm:$0xff]
        %v409 = vld [vmem:[%s4] sm:$0x3]
        %v411 = vlaneseq
        %v412 = vshrl.u32 %v411, 7
        %v413 = vsub.s32 0, %v412
        %v414 = vrot.slane %v409, %v413
        %v415 = vlaneseq
        %v416 = vshrl.u32 %v415, 7
        %v417 = vsub.s32 1, %v416
        %v418 = vrot.slane %v409, %v417
        %v453 = vunpack.c.l.b16 %v377
        %v454 = vunpack.c.h.b16 %v377
        %v455 = vunpack.c.l.b16 %v378
        %v456 = vunpack.c.h.b16 %v378
        %v457 = vunpack.c.l.b16 %v379
        %v458 = vunpack.c.h.b16 %v379
        %v459 = vunpack.c.l.b16 %v380
        %v460 = vunpack.c.h.b16 %v380
        %v461 = vunpack.c.l.b16 %v381
        %v462 = vunpack.c.h.b16 %v381
        %v463 = vunpack.c.l.b16 %v382
        %v464 = vunpack.c.h.b16 %v382
        %v465 = vunpack.c.l.b16 %v383
        %v466 = vunpack.c.h.b16 %v383
        %v467 = vunpack.c.l.b16 %v384
        %v468 = vunpack.c.h.b16 %v384
        %v469 = vunpack.c.l.b16 %v385
        %v470 = vunpack.c.h.b16 %v385
        %v471 = vunpack.c.l.b16 %v386
        %v472 = vunpack.c.h.b16 %v386
        %v473 = vunpack.c.l.b16 %v387
        %v474 = vunpack.c.h.b16 %v387
        %v475 = vunpack.c.l.b16 %v388
        %v476 = vunpack.c.h.b16 %v388
        %v477 = vunpack.c.l.b16 %v389
        %v478 = vunpack.c.h.b16 %v389
        %v479 = vunpack.c.l.b16 %v390
        %v480 = vunpack.c.h.b16 %v390
        %v481 = vunpack.c.l.b16 %v391
        %v482 = vunpack.c.h.b16 %v391
        %v483 = vunpack.c.l.b16 %v392
        %v484 = vunpack.c.h.b16 %v392
        %v485 = vunpack.c.l.b16 %v393
        %v486 = vunpack.c.h.b16 %v393
        %v487 = vunpack.c.l.b16 %v394
        %v488 = vunpack.c.h.b16 %v394
        %v489 = vunpack.c.l.b16 %v395
        %v490 = vunpack.c.h.b16 %v395
        %v491 = vunpack.c.l.b16 %v396
        %v492 = vunpack.c.h.b16 %v396
        %v493 = vunpack.c.l.b16 %v397
        %v494 = vunpack.c.h.b16 %v397
        %v495 = vunpack.c.l.b16 %v398
        %v496 = vunpack.c.h.b16 %v398
        %v497 = vunpack.c.l.b16 %v399
        %v498 = vunpack.c.h.b16 %v399
        %v499 = vunpack.c.l.b16 %v400
        %v500 = vunpack.c.h.b16 %v400
        %v501 = vunpack.c.l.b16 %v401
        %v502 = vunpack.c.h.b16 %v401
        %v503 = vunpack.c.l.b16 %v402
        %v504 = vunpack.c.h.b16 %v402
        %v505 = vunpack.c.l.b16 %v403
        %v506 = vunpack.c.h.b16 %v403
        %v507 = vunpack.c.l.b16 %v404
        %v508 = vunpack.c.h.b16 %v404
        %v509 = vunpack.c.l.b16 %v405
        %v510 = vunpack.c.h.b16 %v405
        %v511 = vunpack.c.l.b16 %v406
        %v512 = vunpack.c.h.b16 %v406
        %v513 = vunpack.c.l.b16 %v407
        %v514 = vunpack.c.h.b16 %v407
        %v515 = vunpack.c.l.b16 %v408
        %v516 = vunpack.c.h.b16 %v408
        %v517 = vpack.c.b16 %v455, %v453
        %v518 = vpack.c.b16 %v456, %v454
        %v519 = vpack.c.b16 %v459, %v457
        %v520 = vpack.c.b16 %v460, %v458
        %v521 = vpack.c.b16 %v463, %v461
        %v522 = vpack.c.b16 %v464, %v462
        %v523 = vpack.c.b16 %v467, %v465
        %v524 = vpack.c.b16 %v468, %v466
        %v525 = vpack.c.b16 %v471, %v469
        %v526 = vpack.c.b16 %v472, %v470
        %v527 = vpack.c.b16 %v475, %v473
        %v528 = vpack.c.b16 %v476, %v474
        %v529 = vpack.c.b16 %v479, %v477
        %v530 = vpack.c.b16 %v480, %v478
        %v531 = vpack.c.b16 %v483, %v481
        %v532 = vpack.c.b16 %v484, %v482
        %v533 = vpack.c.b16 %v487, %v485
        %v534 = vpack.c.b16 %v488, %v486
        %v535 = vpack.c.b16 %v491, %v489
        %v536 = vpack.c.b16 %v492, %v490
        %v537 = vpack.c.b16 %v495, %v493
        %v538 = vpack.c.b16 %v496, %v494
        %v539 = vpack.c.b16 %v499, %v497
        %v540 = vpack.c.b16 %v500, %v498
        %v541 = vpack.c.b16 %v503, %v501
        %v542 = vpack.c.b16 %v504, %v502
        %v543 = vpack.c.b16 %v507, %v505
        %v544 = vpack.c.b16 %v508, %v506
        %v545 = vpack.c.b16 %v511, %v509
        %v546 = vpack.c.b16 %v512, %v510
        %v547 = vpack.c.b16 %v515, %v513
        %v548 = vpack.c.b16 %v516, %v514
        %581 = vmatprep.subr.bf16.mxu0 %v518
        %582 = vmatpush1.bf16.msra.mxu0 %v517
        %583 = vmatprep.subr.bf16.mxu0 %v520
        %584 = vmatpush1.bf16.msra.mxu0 %v519
        %585 = vmatprep.subr.bf16.mxu0 %v522
        %586 = vmatpush1.bf16.msra.mxu0 %v521
        %587 = vmatprep.subr.bf16.mxu0 %v524
        %588 = vmatpush1.bf16.msra.mxu0 %v523
        %589 = vmatprep.subr.bf16.mxu0 %v526
        %590 = vmatpush1.bf16.msra.mxu0 %v525
        %591 = vmatprep.subr.bf16.mxu0 %v528
        %592 = vmatpush1.bf16.msra.mxu0 %v527
        %593 = vmatprep.subr.bf16.mxu0 %v530
        %594 = vmatpush1.bf16.msra.mxu0 %v529
        %595 = vmatprep.subr.bf16.mxu0 %v532
        %596 = vmatpush1.bf16.msra.mxu0 %v531
        %597 = vmatprep.subr.bf16.mxu0 %v534
        %598 = vmatpush1.bf16.msra.mxu0 %v533
        %599 = vmatprep.subr.bf16.mxu0 %v536
        %600 = vmatpush1.bf16.msra.mxu0 %v535
        %601 = vmatprep.subr.bf16.mxu0 %v538
        %602 = vmatpush1.bf16.msra.mxu0 %v537
        %603 = vmatprep.subr.bf16.mxu0 %v540
        %604 = vmatpush1.bf16.msra.mxu0 %v539
        %605 = vmatprep.subr.bf16.mxu0 %v542
        %606 = vmatpush1.bf16.msra.mxu0 %v541
        %607 = vmatprep.subr.bf16.mxu0 %v544
        %608 = vmatpush1.bf16.msra.mxu0 %v543
        %609 = vmatprep.subr.bf16.mxu0 %v546
        %610 = vmatpush1.bf16.msra.mxu0 %v545
        %611 = vmatprep.subr.bf16.mxu0 %v548
        %612 = vmatpush1.bf16.msra.mxu0 %v547
        %613 = vmatprep.mubr.bf16.mxu0 %v376
        %614 = vmatmul.mubr.bf16.gmra.mrb[0].mxu0 %v375
        %v615 = vpop.f32.mrb[0].mxu0
        %v616 = vadd.f32 %v414, %v615
        %v617 = vpop.f32.mrb[0].mxu0
        %v618 = vadd.f32 %v418, %v617
        %v619 = vpop.f32.mrb[0].mxu0
        %v620 = vpop.f32.mrb[0].mxu0
        %621 = vdwg.mxu0
        %v622 = vmax.f32 %v616, 0.0
        %v623 = vmax.f32 %v618, 0.0
        %v624 = vpack.c.bf16 %v622, %v622
        %v625 = vpack.c.bf16 %v623, %v623
        %v626 = vld [vmem:[%s5] sm:$0xf]
        %v627 = vld [vmem:[%s5 + $0x4] sm:$0xf]
        %v628 = vld [vmem:[%s5 + $0x8] sm:$0xf]
        %v629 = vld [vmem:[%s5 + $0xc] sm:$0xf]
        %v630 = vld [vmem:[%s5 + $0x10] sm:$0xf]
        %v631 = vld [vmem:[%s5 + $0x14] sm:$0xf]
        %v632 = vld [vmem:[%s5 + $0x18] sm:$0xf]
        %v633 = vld [vmem:[%s5 + $0x1c] sm:$0xf]
        %v634 = vld [vmem:[%s5 + $0x20] sm:$0xf]
        %v635 = vld [vmem:[%s5 + $0x24] sm:$0xf]
        %v636 = vld [vmem:[%s5 + $0x28] sm:$0xf]
        %v637 = vld [vmem:[%s5 + $0x2c] sm:$0xf]
        %v638 = vld [vmem:[%s5 + $0x30] sm:$0xf]
        %v639 = vld [vmem:[%s5 + $0x34] sm:$0xf]
        %v640 = vld [vmem:[%s5 + $0x38] sm:$0xf]
        %v641 = vld [vmem:[%s5 + $0x3c] sm:$0xf]
        %v642 = vld [vmem:[%s5 + $0x40] sm:$0xf]
        %v643 = vld [vmem:[%s5 + $0x44] sm:$0xf]
        %v644 = vld [vmem:[%s5 + $0x48] sm:$0xf]
        %v645 = vld [vmem:[%s5 + $0x4c] sm:$0xf]
        %v646 = vld [vmem:[%s5 + $0x50] sm:$0xf]
        %v647 = vld [vmem:[%s5 + $0x54] sm:$0xf]
        %v648 = vld [vmem:[%s5 + $0x58] sm:$0xf]
        %v649 = vld [vmem:[%s5 + $0x5c] sm:$0xf]
        %v650 = vld [vmem:[%s5 + $0x60] sm:$0xf]
        %v651 = vld [vmem:[%s5 + $0x64] sm:$0xf]
        %v652 = vld [vmem:[%s5 + $0x68] sm:$0xf]
        %v653 = vld [vmem:[%s5 + $0x6c] sm:$0xf]
        %v654 = vld [vmem:[%s5 + $0x70] sm:$0xf]
        %v655 = vld [vmem:[%s5 + $0x74] sm:$0xf]
        %v656 = vld [vmem:[%s5 + $0x78] sm:$0xf]
        %v657 = vld [vmem:[%s5 + $0x7c] sm:$0xf]
        %v658 = vld [vmem:[%s6] sm:$0x1]
        %v660 = vlaneseq
        %v661 = vshrl.u32 %v660, 7
        %v662 = vsub.s32 0, %v661
        %v663 = vrot.slane %v658, %v662
        %v697 = vunpack.c.l.b16 %v626
        %v698 = vunpack.c.l.b16 %v627
        %v699 = vunpack.c.l.b16 %v628
        %v700 = vunpack.c.l.b16 %v629
        %v701 = vunpack.c.l.b16 %v630
        %v702 = vunpack.c.l.b16 %v631
        %v703 = vunpack.c.l.b16 %v632
        %v704 = vunpack.c.l.b16 %v633
        %v705 = vunpack.c.l.b16 %v634
        %v706 = vunpack.c.l.b16 %v635
        %v707 = vunpack.c.l.b16 %v636
        %v708 = vunpack.c.l.b16 %v637
        %v709 = vunpack.c.l.b16 %v638
        %v710 = vunpack.c.l.b16 %v639
        %v711 = vunpack.c.l.b16 %v640
        %v712 = vunpack.c.l.b16 %v641
        %v713 = vunpack.c.l.b16 %v642
        %v714 = vunpack.c.l.b16 %v643
        %v715 = vunpack.c.l.b16 %v644
        %v716 = vunpack.c.l.b16 %v645
        %v717 = vunpack.c.l.b16 %v646
        %v718 = vunpack.c.l.b16 %v647
        %v719 = vunpack.c.l.b16 %v648
        %v720 = vunpack.c.l.b16 %v649
        %v721 = vunpack.c.l.b16 %v650
        %v722 = vunpack.c.l.b16 %v651
        %v723 = vunpack.c.l.b16 %v652
        %v724 = vunpack.c.l.b16 %v653
        %v725 = vunpack.c.l.b16 %v654
        %v726 = vunpack.c.l.b16 %v655
        %v727 = vunpack.c.l.b16 %v656
        %v728 = vunpack.c.l.b16 %v657
        %v729 = vpack.c.b16 %v698, %v697
        %v730 = vpack.c.b16 %v700, %v699
        %v731 = vpack.c.b16 %v702, %v701
        %v732 = vpack.c.b16 %v704, %v703
        %v733 = vpack.c.b16 %v706, %v705
        %v734 = vpack.c.b16 %v708, %v707
        %v735 = vpack.c.b16 %v710, %v709
        %v736 = vpack.c.b16 %v712, %v711
        %v737 = vpack.c.b16 %v714, %v713
        %v738 = vpack.c.b16 %v716, %v715
        %v739 = vpack.c.b16 %v718, %v717
        %v740 = vpack.c.b16 %v720, %v719
        %v741 = vpack.c.b16 %v722, %v721
        %v742 = vpack.c.b16 %v724, %v723
        %v743 = vpack.c.b16 %v726, %v725
        %v744 = vpack.c.b16 %v728, %v727
        %761 = vmatprep.subr.bf16.mxu0 0
        %762 = vmatpush1.bf16.msra.mxu0 %v729
        %763 = vmatprep.subr.bf16.mxu0 0
        %764 = vmatpush1.bf16.msra.mxu0 %v730
        %765 = vmatprep.subr.bf16.mxu0 0
        %766 = vmatpush1.bf16.msra.mxu0 %v731
        %767 = vmatprep.subr.bf16.mxu0 0
        %768 = vmatpush1.bf16.msra.mxu0 %v732
        %769 = vmatprep.subr.bf16.mxu0 0
        %770 = vmatpush1.bf16.msra.mxu0 %v733
        %771 = vmatprep.subr.bf16.mxu0 0
        %772 = vmatpush1.bf16.msra.mxu0 %v734
        %773 = vmatprep.subr.bf16.mxu0 0
        %774 = vmatpush1.bf16.msra.mxu0 %v735
        %775 = vmatprep.subr.bf16.mxu0 0
        %776 = vmatpush1.bf16.msra.mxu0 %v736
        %777 = vmatprep.subr.bf16.mxu0 0
        %778 = vmatpush1.bf16.msra.mxu0 %v737
        %779 = vmatprep.subr.bf16.mxu0 0
        %780 = vmatpush1.bf16.msra.mxu0 %v738
        %781 = vmatprep.subr.bf16.mxu0 0
        %782 = vmatpush1.bf16.msra.mxu0 %v739
        %783 = vmatprep.subr.bf16.mxu0 0
        %784 = vmatpush1.bf16.msra.mxu0 %v740
        %785 = vmatprep.subr.bf16.mxu0 0
        %786 = vmatpush1.bf16.msra.mxu0 %v741
        %787 = vmatprep.subr.bf16.mxu0 0
        %788 = vmatpush1.bf16.msra.mxu0 %v742
        %789 = vmatprep.subr.bf16.mxu0 0
        %790 = vmatpush1.bf16.msra.mxu0 %v743
        %791 = vmatprep.subr.bf16.mxu0 0
        %792 = vmatpush1.bf16.msra.mxu0 %v744
        %793 = vmatprep.mubr.bf16.mxu0 %v625
        %794 = vmatmul.mubr.bf16.gmra.mrb[0].mxu0 %v624
        %v795 = vpop.f32.mrb[0].mxu0
        %v796 = vadd.f32 %v663, %v795
        %v797 = vpop.f32.mrb[0].mxu0
        %v798 = vpop.f32.mrb[0].mxu0
        %v799 = vpop.f32.mrb[0].mxu0
        %800 = vdwg.mxu0
        %vm801 = vcmask 130048
        %802 = vst.msk [vmem:[%s288] sm:$0xff] %vm801, %v796
        %p803 = scmp.lt.s32.totalorder %s19, 3
        %s804 = scalar_select %p803, %s19, 3
        %s805 = smul.addr %s804, 8
        %s806 = scalar_lea.vmem %s7, %s805
        // Predicated region
        $region53: #{tpu_custom_call.1} parent=47 // pred_check
          %p807 = pneg %p189
        $region54: #{tpu_custom_call.1} parent=47 // pred_check_branch
          %809 = sbr.rel (%p807) target = $region56
        $region55: #{tpu_custom_call.1} parent=47 // pred_region
          _
        $region56: #{tpu_custom_call.1} parent=47 // pred_fallthru
          _
      $region48: #{tpu_custom_call.1} parent=5 // pred_fallthru
        _
      %p810 = scmp.le.s32.totalorder 2, %s14
      // Predicated region
      $region57: #{tpu_custom_call.1} parent=5 // pred_check
        %p811 = pneg %p810
      $region58: #{tpu_custom_call.1} parent=5 // pred_check_branch
        %813 = sbr.rel (%p811) target = $region60
      $region59: #{tpu_custom_call.1} parent=5 // pred_region
        %s814 = ssub.s32 %s14, 2
        // Predicated region
        $region61: #{tpu_custom_call.1} parent=59 // pred_check
          %p815 = pneg %p195
        $region62: #{tpu_custom_call.1} parent=59 // pred_check_branch
          %817 = sbr.rel (%p815) target = $region64
        $region63: #{tpu_custom_call.1} parent=59 // pred_region
          %p818 = scmp.lt.s32.totalorder %s20, 3
          %s819 = scalar_select %p818, %s20, 3
          %s820 = smul.addr %s819, 8
          %s821 = scalar_lea.vmem %s7, %s820
        $region64: #{tpu_custom_call.1} parent=59 // pred_fallthru
          _
      $region60: #{tpu_custom_call.1} parent=5 // pred_fallthru
        _
    $region6: #{tpu_custom_call.1} parent=1 // loop_footer
      %s18 = sadd.s32 1, %s14
    $region7: #{tpu_custom_call.1} parent=1 // loop_footer_branch
      %13 = sbr.rel target = $region3
    $region8: #{tpu_custom_call.1} parent=1 // loop_exit
      _
    %822 = vsyncpa [#allocation3], 1
    %s823 = scalar_lea.sflag [#allocation3], 1
    %824 = vsyncpa %s823, 1

</llo_original>
